<compile_context>
chip_gen: v7x
topology: tpu7x:2x2x1
jax: 0.10.0
libtpu: 0.0.40
codegen_flags: <defaults>
</compile_context>

<pallas_src>
import functools

import jax
import jax.numpy as jnp
from jax.experimental import pallas as pl
from jax.experimental.pallas import tpu as pltpu

_LANES = 128
_MAX_TILE_HW = 2048       # lane-axis tile cap: f32 tile <= 1 MiB at C_BLK=128
_MAX_C_BLK = 128          # channel (sublane) block cap
_VMEM_LIMIT = 32 * 1024 * 1024


def _pick_block(total, quantum, cap):
    """Largest multiple of `quantum` that divides `total` and is <= cap.

    Falls back to `total` (full extent) when `total` is not a multiple of
    `quantum`, which keeps the (8, 128) BlockSpec constraint satisfied via the
    'equal to full array dim' escape hatch.
    """
    if total % quantum != 0:
        return total
    best = quantum
    t = quantum
    limit = min(total, cap)
    while t <= limit:
        if total % t == 0:
            best = t
        t += quantum
    return best


def _bn_stats_kernel(x_ref, rm_ref, rv_ref,
                     mean_ref, inv_std_ref, new_rm_ref, new_rv_ref,
                     sum_acc, sq_acc,
                     *, eps, momentum, m_total, lanewise):
    """Pass 1: streaming per-channel sum / sum-of-squares over (N, H*W)."""
    n_id = pl.program_id(1)
    t_id = pl.program_id(2)
    is_first = jnp.logical_and(n_id == 0, t_id == 0)
    is_last = jnp.logical_and(n_id == pl.num_programs(1) - 1,
                              t_id == pl.num_programs(2) - 1)

    @pl.when(is_first)
    def _():
        sum_acc[...] = jnp.zeros_like(sum_acc)
        sq_acc[...] = jnp.zeros_like(sq_acc)

    x = x_ref[...].astype(jnp.float32)            # (C_BLK, TILE_HW)
    tile_hw = x.shape[1]

    if lanewise:
        # Fold the lane axis in aligned 128-wide chunks: static lane slices
        # (no relayout) + VPU adds only; the expensive cross-lane reduce is
        # deferred to the epilogue (once per channel block, not per tile).
        s = sum_acc[...]
        q = sq_acc[...]
        for j in range(tile_hw // _LANES):
            chunk = x[:, j * _LANES:(j + 1) * _LANES]
            s = s + chunk
            q = q + chunk * chunk
        sum_acc[...] = s
        sq_acc[...] = q
    else:
        # Fallback when H*W is not a multiple of 128 (single full-HW tile):
        # per-tile cross-lane reduce, deposited on lane 0 of the accumulator.
        part_s = jnp.sum(x, axis=1, keepdims=True)
        part_q = jnp.sum(x * x, axis=1, keepdims=True)
        lane = jax.lax.broadcasted_iota(jnp.int32, sum_acc.shape, 1)
        sum_acc[...] += jnp.where(lane == 0, part_s, 0.0)
        sq_acc[...] += jnp.where(lane == 0, part_q, 0.0)

    @pl.when(is_last)
    def _():
        inv_m = 1.0 / float(m_total)
        mean = jnp.sum(sum_acc[...], axis=1, keepdims=True) * inv_m   # (C_BLK,1)
        ex2 = jnp.sum(sq_acc[...], axis=1, keepdims=True) * inv_m
        # E[x^2] - mean^2 accumulated in f32; clamp guards the rare
        # catastrophic-cancellation case.
        var = jnp.maximum(ex2 - mean * mean, 0.0)

        mean_ref[...] = mean.astype(mean_ref.dtype)
        inv_std_ref[...] = jax.lax.rsqrt(var + eps).astype(inv_std_ref.dtype)

        if m_total > 1:   # static (trace-time) branch; shapes are static
            unbiased = var * (float(m_total) / float(m_total - 1))
        else:
            unbiased = var
        new_rm_ref[...] = ((1.0 - momentum) * rm_ref[...].astype(jnp.float32)
                           + momentum * mean).astype(new_rm_ref.dtype)
        new_rv_ref[...] = ((1.0 - momentum) * rv_ref[...].astype(jnp.float32)
                           + momentum * unbiased).astype(new_rv_ref.dtype)


def _bn_norm_kernel(x_ref, mean_ref, inv_std_ref, w_ref, b_ref, y_ref):
    """Pass 2: y = (x - mean) * inv_std * weight + bias, streamed per tile."""
    x = x_ref[...].astype(jnp.float32)             # (C_BLK, TILE_HW)
    scale = inv_std_ref[...] * w_ref[...]          # (C_BLK, 1)
    shift = b_ref[...] - mean_ref[...] * scale     # (C_BLK, 1)
    y_ref[...] = (x * scale + shift).astype(y_ref.dtype)


def custom_batchnorm_forward(x_nchw, weight, bias, running_mean, running_var,
                             *, training=True, momentum=0.1, eps=1e-5):
    """Forward pass of CustomBatchNorm.

    Args:
      x_nchw: (N, C, H, W) input.
      weight, bias, running_mean, running_var: (C,) parameters / buffers.
    Returns:
      training: (y_nchw, new_running_mean, new_running_var)
      eval:      y_nchw
    """
    n, c, h, w = x_nchw.shape
    hw = h * w
    m_total = n * hw

    c_blk = _pick_block(c, 8, _MAX_C_BLK)
    tile_hw = _pick_block(hw, _LANES, _MAX_TILE_HW)
    lanewise = (tile_hw % _LANES == 0)
    num_c_blocks = c // c_blk
    num_hw_tiles = hw // tile_hw

    # Free, contiguous view -- no HBM transpose passes.
    x_view = x_nchw.reshape(n, c, hw)

    w_c = weight.reshape(c, 1).astype(jnp.float32)
    b_c = bias.reshape(c, 1).astype(jnp.float32)
    rm_c = running_mean.reshape(c, 1).astype(jnp.float32)
    rv_c = running_var.reshape(c, 1).astype(jnp.float32)

    # N dim squeezed (block size 1); kernel tiles are (C_BLK, TILE_HW).
    # TODO(synk): if profiling shows exposed DMA on v7x, add
    # pipeline_mode=pl.Buffered(3) to this spec.
    x_spec = pl.BlockSpec((None, c_blk, tile_hw),
                          lambda cb, ni, ti: (ni, cb, ti))
    param_spec = pl.BlockSpec((c_blk, 1), lambda cb, ni, ti: (cb, 0))

    grid = (num_c_blocks, n, num_hw_tiles)

    if training:
        stats_kernel = functools.partial(
            _bn_stats_kernel, eps=float(eps), momentum=float(momentum),
            m_total=m_total, lanewise=lanewise)
        mean_c, inv_std_c, new_rm, new_rv = pl.pallas_call(
            stats_kernel,
            out_shape=(
                jax.ShapeDtypeStruct((c, 1), jnp.float32),
                jax.ShapeDtypeStruct((c, 1), jnp.float32),
                jax.ShapeDtypeStruct((c, 1), jnp.float32),
                jax.ShapeDtypeStruct((c, 1), jnp.float32),
            ),
            grid_spec=pltpu.PrefetchScalarGridSpec(
                num_scalar_prefetch=0,
                grid=grid,
                in_specs=[x_spec, param_spec, param_spec],
                out_specs=(param_spec, param_spec, param_spec, param_spec),
                scratch_shapes=[pltpu.VMEM((c_blk, _LANES), jnp.float32),
                                pltpu.VMEM((c_blk, _LANES), jnp.float32)]),
            compiler_params=pltpu.CompilerParams(
                dimension_semantics=("parallel", "arbitrary", "arbitrary"),
                vmem_limit_bytes=_VMEM_LIMIT),
        )(x_view, rm_c, rv_c)
    else:
        mean_c = rm_c
        inv_std_c = jax.lax.rsqrt(rv_c + jnp.float32(eps))

    y_view = pl.pallas_call(
        _bn_norm_kernel,
        out_shape=jax.ShapeDtypeStruct((n, c, hw), x_nchw.dtype),
        grid_spec=pltpu.PrefetchScalarGridSpec(
            num_scalar_prefetch=0,
            grid=grid,
            in_specs=[x_spec, param_spec, param_spec, param_spec, param_spec],
            out_specs=x_spec),
        compiler_params=pltpu.CompilerParams(
            dimension_semantics=("parallel", "parallel", "parallel"),
            vmem_limit_bytes=_VMEM_LIMIT),
    )(x_view, mean_c, inv_std_c, w_c, b_c)

    y_nchw = y_view.reshape(n, c, h, w)
    if training:
        return y_nchw, new_rm.reshape(c), new_rv.reshape(c)
    return y_nchw


def _reference_bn_train(x, weight, bias, eps):
    xf = x.astype(jnp.float32)
    mean = jnp.mean(xf, axis=(0, 2, 3), keepdims=True)
    var = jnp.mean((xf - mean) ** 2, axis=(0, 2, 3), keepdims=True)
    y = (xf - mean) / jnp.sqrt(var + eps)
    return y * weight.reshape(1, -1, 1, 1) + bias.reshape(1, -1, 1, 1)


if __name__ == "__main__":
    key = jax.random.PRNGKey(0)

    # Small shapes consistent with a 2D batchnorm over NCHW conv activations.
    N, C, H, W = 2, 4, 16, 16
    x = jax.random.normal(key, (N, C, H, W), dtype=jnp.float32)

    # Deterministic parameter init, matching reset_parameters():
    #   weight = ones, bias = zeros, running_mean = zeros, running_var = ones.
    weight = jnp.ones((C,), dtype=jnp.float32)
    bias = jnp.zeros((C,), dtype=jnp.float32)
    running_mean = jnp.zeros((C,), dtype=jnp.float32)
    running_var = jnp.ones((C,), dtype=jnp.float32)

    eps = 1e-5
    momentum = 0.1

    # Training-mode forward (the module's default path).
    y, new_rm, new_rv = custom_batchnorm_forward(
        x, weight, bias, running_mean, running_var,
        training=True, momentum=momentum, eps=eps)
    y = jax.block_until_ready(y)
    new_rm = jax.block_until_ready(new_rm)
    new_rv = jax.block_until_ready(new_rv)

    # Eval-mode forward (uses running statistics).
    y_eval = jax.block_until_ready(
        custom_batchnorm_forward(
            x, weight, bias, running_mean, running_var,
            training=False, momentum=momentum, eps=eps))

    # Correctness checks against pure-JAX references.
    y_ref = _reference_bn_train(x, weight, bias, eps)
    assert jnp.allclose(y, y_ref, atol=1e-4, rtol=1e-4), "train output mismatch"

    mean_ref = jnp.mean(x, axis=(0, 2, 3))
    var_ref = jnp.var(x, axis=(0, 2, 3))
    m = N * H * W
    unbiased_ref = var_ref * m / (m - 1)
    assert jnp.allclose(new_rm, (1 - momentum) * running_mean + momentum * mean_ref,
                        atol=1e-5), "running_mean mismatch"
    assert jnp.allclose(new_rv, (1 - momentum) * running_var + momentum * unbiased_ref,
                        atol=1e-5), "running_var mismatch"

    y_eval_ref = ((x - running_mean.reshape(1, -1, 1, 1))
                  / jnp.sqrt(running_var.reshape(1, -1, 1, 1) + eps)
                  * weight.reshape(1, -1, 1, 1) + bias.reshape(1, -1, 1, 1))
    assert jnp.allclose(y_eval, y_eval_ref, atol=1e-4, rtol=1e-4), "eval mismatch"

    print("KERNEL_OK")
</pallas_src>

<mosaic_0001>
module attributes {stable_mosaic.version = 11 : i64} {
  func.func @_bn_stats_kernel(%arg0: i32, %arg1: i32, %arg2: i32, %arg3: memref<1x4x256xf32, #tpu.memory_space<vmem>>, %arg4: memref<4x1xf32, #tpu.memory_space<vmem>>, %arg5: memref<4x1xf32, #tpu.memory_space<vmem>>, %arg6: memref<4x1xf32, #tpu.memory_space<vmem>>, %arg7: memref<4x1xf32, #tpu.memory_space<vmem>>, %arg8: memref<4x1xf32, #tpu.memory_space<vmem>>, %arg9: memref<4x1xf32, #tpu.memory_space<vmem>>, %arg10: memref<4x128xf32, #tpu.memory_space<vmem>>, %arg11: memref<4x128xf32, #tpu.memory_space<vmem>>) attributes {dimension_semantics = [#tpu.dimension_semantics<parallel>, #tpu.dimension_semantics<arbitrary>, #tpu.dimension_semantics<arbitrary>], iteration_bounds = array<i64: 1, 2, 1>, scalar_prefetch = 0 : i64, scratch_operands = 2 : i64, tpu.core_type = #tpu.core_type<tc>, window_params = [{transform_indices = @transform_0, window_bounds = array<i64: 1, 4, 256>}, {transform_indices = @transform_1, window_bounds = array<i64: 4, 1>}, {transform_indices = @transform_2, window_bounds = array<i64: 4, 1>}, {transform_indices = @transform_3, window_bounds = array<i64: 4, 1>}, {transform_indices = @transform_4, window_bounds = array<i64: 4, 1>}, {transform_indices = @transform_5, window_bounds = array<i64: 4, 1>}, {transform_indices = @transform_6, window_bounds = array<i64: 4, 1>}]} {
    %c0_i32 = arith.constant 0 : i32
    %0 = arith.cmpi eq, %arg1, %c0_i32 : i32
    %c0_i32_0 = arith.constant 0 : i32
    %1 = arith.cmpi eq, %arg2, %c0_i32_0 : i32
    %2 = arith.andi %0, %1 : i1
    %c1_i32 = arith.constant 1 : i32
    %3 = arith.cmpi eq, %arg1, %c1_i32 : i32
    %c0_i32_1 = arith.constant 0 : i32
    %4 = arith.cmpi eq, %arg2, %c0_i32_1 : i32
    %5 = arith.andi %3, %4 : i1
    %6 = arith.extui %2 : i1 to i32
    %c0_i32_2 = arith.constant 0 : i32
    %7 = arith.cmpi ne, %6, %c0_i32_2 : i32
    scf.if %7 {
      %cst = arith.constant 0.000000e+00 : f32
      %24 = vector.broadcast %cst : f32 to vector<4x128xf32>
      %c0_14 = arith.constant 0 : index
      %c0_15 = arith.constant 0 : index
      %25 = vector.load %arg10[%c0_14, %c0_15] : memref<4x128xf32, #tpu.memory_space<vmem>>, vector<4x128xf32>
      tpu.vector_store %arg10[%c0_14, %c0_15], %24 {strides = array<i32>} : memref<4x128xf32, #tpu.memory_space<vmem>>, vector<4x128xf32>,
      %cst_16 = arith.constant 0.000000e+00 : f32
      %26 = vector.broadcast %cst_16 : f32 to vector<4x128xf32>
      %c0_17 = arith.constant 0 : index
      %c0_18 = arith.constant 0 : index
      %27 = vector.load %arg11[%c0_17, %c0_18] : memref<4x128xf32, #tpu.memory_space<vmem>>, vector<4x128xf32>
      tpu.vector_store %arg11[%c0_17, %c0_18], %26 {strides = array<i32>} : memref<4x128xf32, #tpu.memory_space<vmem>>, vector<4x128xf32>,
    } else {
    }
    %c0 = arith.constant 0 : index
    %c0_3 = arith.constant 0 : index
    %c0_4 = arith.constant 0 : index
    %8 = vector.load %arg3[%c0, %c0_3, %c0_4] : memref<1x4x256xf32, #tpu.memory_space<vmem>>, vector<1x4x256xf32>
    %9 = vector.shape_cast %8 : vector<1x4x256xf32> to vector<4x256xf32>
    %c0_5 = arith.constant 0 : index
    %c0_6 = arith.constant 0 : index
    %10 = vector.load %arg10[%c0_5, %c0_6] : memref<4x128xf32, #tpu.memory_space<vmem>>, vector<4x128xf32>
    %c0_7 = arith.constant 0 : index
    %c0_8 = arith.constant 0 : index
    %11 = vector.load %arg11[%c0_7, %c0_8] : memref<4x128xf32, #tpu.memory_space<vmem>>, vector<4x128xf32>
    %12 = vector.extract_strided_slice %9 {offsets = [0, 0], sizes = [4, 128], strides = [1, 1]} : vector<4x256xf32> to vector<4x128xf32>
    %13 = arith.addf %10, %12 : vector<4x128xf32>
    %14 = arith.mulf %12, %12 : vector<4x128xf32>
    %15 = arith.addf %11, %14 : vector<4x128xf32>
    %16 = vector.extract_strided_slice %9 {offsets = [0, 128], sizes = [4, 128], strides = [1, 1]} : vector<4x256xf32> to vector<4x128xf32>
    %17 = arith.addf %13, %16 : vector<4x128xf32>
    %18 = arith.mulf %16, %16 : vector<4x128xf32>
    %19 = arith.addf %15, %18 : vector<4x128xf32>
    %c0_9 = arith.constant 0 : index
    %c0_10 = arith.constant 0 : index
    %20 = vector.load %arg10[%c0_9, %c0_10] : memref<4x128xf32, #tpu.memory_space<vmem>>, vector<4x128xf32>
    tpu.vector_store %arg10[%c0_9, %c0_10], %17 {strides = array<i32>} : memref<4x128xf32, #tpu.memory_space<vmem>>, vector<4x128xf32>,
    %c0_11 = arith.constant 0 : index
    %c0_12 = arith.constant 0 : index
    %21 = vector.load %arg11[%c0_11, %c0_12] : memref<4x128xf32, #tpu.memory_space<vmem>>, vector<4x128xf32>
    tpu.vector_store %arg11[%c0_11, %c0_12], %19 {strides = array<i32>} : memref<4x128xf32, #tpu.memory_space<vmem>>, vector<4x128xf32>,
    %22 = arith.extui %5 : i1 to i32
    %c0_i32_13 = arith.constant 0 : i32
    %23 = arith.cmpi ne, %22, %c0_i32_13 : i32
    scf.if %23 {
      %c0_14 = arith.constant 0 : index
      %c0_15 = arith.constant 0 : index
      %24 = vector.load %arg10[%c0_14, %c0_15] : memref<4x128xf32, #tpu.memory_space<vmem>>, vector<4x128xf32>
      %cst = arith.constant dense<0.000000e+00> : vector<4xf32>
      %25 = vector.multi_reduction <add>, %24, %cst [1] : vector<4x128xf32> to vector<4xf32>
      %26 = vector.shape_cast %25 : vector<4xf32> to vector<4x1xf32>
      %cst_16 = arith.constant 0.001953125 : f32
      %27 = vector.broadcast %cst_16 : f32 to vector<4x1xf32>
      %28 = arith.mulf %26, %27 : vector<4x1xf32>
      %c0_17 = arith.constant 0 : index
      %c0_18 = arith.constant 0 : index
      %29 = vector.load %arg11[%c0_17, %c0_18] : memref<4x128xf32, #tpu.memory_space<vmem>>, vector<4x128xf32>
      %cst_19 = arith.constant dense<0.000000e+00> : vector<4xf32>
      %30 = vector.multi_reduction <add>, %29, %cst_19 [1] : vector<4x128xf32> to vector<4xf32>
      %31 = vector.shape_cast %30 : vector<4xf32> to vector<4x1xf32>
      %cst_20 = arith.constant 0.001953125 : f32
      %32 = vector.broadcast %cst_20 : f32 to vector<4x1xf32>
      %33 = arith.mulf %31, %32 : vector<4x1xf32>
      %34 = arith.mulf %28, %28 : vector<4x1xf32>
      %35 = arith.subf %33, %34 : vector<4x1xf32>
      %cst_21 = arith.constant 0.000000e+00 : f32
      %36 = vector.broadcast %cst_21 : f32 to vector<4x1xf32>
      %37 = arith.maximumf %35, %36 : vector<4x1xf32>
      %c0_22 = arith.constant 0 : index
      %c0_23 = arith.constant 0 : index
      %38 = vector.load %arg6[%c0_22, %c0_23] : memref<4x1xf32, #tpu.memory_space<vmem>>, vector<4x1xf32>
      tpu.vector_store %arg6[%c0_22, %c0_23], %28 {strides = array<i32>} : memref<4x1xf32, #tpu.memory_space<vmem>>, vector<4x1xf32>,
      %cst_24 = arith.constant 9.99999974E-6 : f32
      %39 = vector.broadcast %cst_24 : f32 to vector<4x1xf32>
      %40 = arith.addf %37, %39 : vector<4x1xf32>
      %41 = math.rsqrt %40 : vector<4x1xf32>
      %c0_25 = arith.constant 0 : index
      %c0_26 = arith.constant 0 : index
      %42 = vector.load %arg7[%c0_25, %c0_26] : memref<4x1xf32, #tpu.memory_space<vmem>>, vector<4x1xf32>
      tpu.vector_store %arg7[%c0_25, %c0_26], %41 {strides = array<i32>} : memref<4x1xf32, #tpu.memory_space<vmem>>, vector<4x1xf32>,
      %cst_27 = arith.constant 1.00195694 : f32
      %43 = vector.broadcast %cst_27 : f32 to vector<4x1xf32>
      %44 = arith.mulf %37, %43 : vector<4x1xf32>
      %c0_28 = arith.constant 0 : index
      %c0_29 = arith.constant 0 : index
      %45 = vector.load %arg4[%c0_28, %c0_29] : memref<4x1xf32, #tpu.memory_space<vmem>>, vector<4x1xf32>
      %cst_30 = arith.constant 0.899999976 : f32
      %46 = vector.broadcast %cst_30 : f32 to vector<4x1xf32>
      %47 = arith.mulf %46, %45 : vector<4x1xf32>
      %cst_31 = arith.constant 1.000000e-01 : f32
      %48 = vector.broadcast %cst_31 : f32 to vector<4x1xf32>
      %49 = arith.mulf %48, %28 : vector<4x1xf32>
      %50 = arith.addf %47, %49 : vector<4x1xf32>
      %c0_32 = arith.constant 0 : index
      %c0_33 = arith.constant 0 : index
      %51 = vector.load %arg8[%c0_32, %c0_33] : memref<4x1xf32, #tpu.memory_space<vmem>>, vector<4x1xf32>
      tpu.vector_store %arg8[%c0_32, %c0_33], %50 {strides = array<i32>} : memref<4x1xf32, #tpu.memory_space<vmem>>, vector<4x1xf32>,
      %c0_34 = arith.constant 0 : index
      %c0_35 = arith.constant 0 : index
      %52 = vector.load %arg5[%c0_34, %c0_35] : memref<4x1xf32, #tpu.memory_space<vmem>>, vector<4x1xf32>
      %cst_36 = arith.constant 0.899999976 : f32
      %53 = vector.broadcast %cst_36 : f32 to vector<4x1xf32>
      %54 = arith.mulf %53, %52 : vector<4x1xf32>
      %cst_37 = arith.constant 1.000000e-01 : f32
      %55 = vector.broadcast %cst_37 : f32 to vector<4x1xf32>
      %56 = arith.mulf %55, %44 : vector<4x1xf32>
      %57 = arith.addf %54, %56 : vector<4x1xf32>
      %c0_38 = arith.constant 0 : index
      %c0_39 = arith.constant 0 : index
      %58 = vector.load %arg9[%c0_38, %c0_39] : memref<4x1xf32, #tpu.memory_space<vmem>>, vector<4x1xf32>
      tpu.vector_store %arg9[%c0_38, %c0_39], %57 {strides = array<i32>} : memref<4x1xf32, #tpu.memory_space<vmem>>, vector<4x1xf32>,
    } else {
    }
    return
  }
  func.func @transform_0(%arg0: i32, %arg1: i32, %arg2: i32) -> (i32, i32, i32) {
    %c0_i32 = arith.constant 0 : i32
    return %arg1, %arg0, %arg2 : i32, i32, i32
  }
  func.func @transform_1(%arg0: i32, %arg1: i32, %arg2: i32) -> (i32, i32) {
    %c0_i32 = arith.constant 0 : i32
    %c0_i32_0 = arith.constant 0 : i32
    return %arg0, %c0_i32 : i32, i32
  }
  func.func @transform_2(%arg0: i32, %arg1: i32, %arg2: i32) -> (i32, i32) {
    %c0_i32 = arith.constant 0 : i32
    %c0_i32_0 = arith.constant 0 : i32
    return %arg0, %c0_i32 : i32, i32
  }
  func.func @transform_3(%arg0: i32, %arg1: i32, %arg2: i32) -> (i32, i32) {
    %c0_i32 = arith.constant 0 : i32
    %c0_i32_0 = arith.constant 0 : i32
    return %arg0, %c0_i32 : i32, i32
  }
  func.func @transform_4(%arg0: i32, %arg1: i32, %arg2: i32) -> (i32, i32) {
    %c0_i32 = arith.constant 0 : i32
    %c0_i32_0 = arith.constant 0 : i32
    return %arg0, %c0_i32 : i32, i32
  }
  func.func @transform_5(%arg0: i32, %arg1: i32, %arg2: i32) -> (i32, i32) {
    %c0_i32 = arith.constant 0 : i32
    %c0_i32_0 = arith.constant 0 : i32
    return %arg0, %c0_i32 : i32, i32
  }
  func.func @transform_6(%arg0: i32, %arg1: i32, %arg2: i32) -> (i32, i32) {
    %c0_i32 = arith.constant 0 : i32
    %c0_i32_0 = arith.constant 0 : i32
    return %arg0, %c0_i32 : i32, i32
  }
}

</mosaic_0001>

<llo_original>
// kernel: tpu_custom_call.1
$region0: #{tpu_custom_call.1}
  #allocation0 [shape = 'u32[]', space=smem, size = 0x4, offset = 0x4, fixed_abs, tag = 'smem constant byte address 0x4 - core index']
  #allocation1 [shape = 'u32[144,128]{1,0:T(1,128)}', space=vmem, size = 0x12000, scoped, tag = 'internal scratch']
  #allocation2 [shape = 'f32[4,128]{1,0:T(4,128)}', space=vmem, size = 0x800, scoped, tag = 'scratch operand']
  #allocation3 [shape = 'f32[4,128]{1,0:T(4,128)}', space=vmem, size = 0x800, scoped, tag = 'scratch operand']
  %s0 = inlined_call_operand.hbm [shape: f32[2,4,256], index: 0, kind: input, shape index: {}]
  %s1 = inlined_call_operand.vmem [shape: f32[4,1], index: 1, kind: input, shape index: {}]
  %s2 = inlined_call_operand.vmem [shape: f32[4,1], index: 2, kind: input, shape index: {}]
  %s3 = inlined_call_operand.vmem [shape: f32[4,1], index: 3, kind: output, shape index: {0}]
  %s4 = inlined_call_operand.vmem [shape: f32[4,1], index: 4, kind: output, shape index: {1}]
  %s5 = inlined_call_operand.vmem [shape: f32[4,1], index: 5, kind: output, shape index: {2}]
  %s6 = inlined_call_operand.vmem [shape: f32[4,1], index: 6, kind: output, shape index: {3}]
  %7 = xla_tuple %s3, %s4, %s5, %s6
  %s8 = sld [smem:[#allocation0]]
  $region81: #{tpu_custom_call.1} parent=0
    _
  %s10 = ssub.s32 1, %s8
  %s11 = scalar_select 0, %s10, %s8
  $region1: #{tpu_custom_call.1} parent=0
    #allocation4 [shape = 'u8[8192]{0}', space=vmem, size = 0x2000, scoped, tag = 'input window, operand 0']
    #allocation5 [shape = 's32[2]{0}', space=sflag, size = 0x8, scoped, tag = 'scoped memory for tpu_custom_call.1']
    %12 = vsyncpa [#allocation5], 0
    %s13 = scalar_lea.sflag [#allocation5], 1
    %14 = vsyncpa %s13, 0
    loop: start=0, step=1, limit=4
    $region2: #{tpu_custom_call.1} parent=1 // loop_pre_header
      _
    $region3: #{tpu_custom_call.1} parent=1 // loop_header
      %s16 = sphi 0, %s20
      %p17 = scmp.ge.s32.totalorder %s16, 4
      %s23 = sphi 0, %s42
      %s24 = sphi 0, %s38
      %s25 = sphi 0, %s34
      %s26 = sphi 0, %s23
      %s27 = sphi 0, %s24
      %s28 = sphi 0, %s25
      %s29 = sphi 0, %s26
      %s30 = sphi 0, %s27
      %s31 = sphi 0, %s28
      %s49 = sphi 0, %s51
      %s52 = sphi 0, %s49
      %s53 = sphi 0, %s52
      %s69 = sphi 0, %s53
      %s75 = sphi 0, %s77
      %s78 = sphi 0, %s75
      %s79 = sphi 0, %s78
      %s95 = sphi 0, %s79
      %s101 = sphi 0, %s103
      %s104 = sphi 0, %s101
      %s105 = sphi 0, %s104
      %s121 = sphi 0, %s105
      %s127 = sphi 0, %s129
      %s130 = sphi 0, %s127
      %s131 = sphi 0, %s130
      %s147 = sphi 0, %s131
      %s153 = sphi 0, %s155
      %s156 = sphi 0, %s153
      %s157 = sphi 0, %s156
      %s173 = sphi 0, %s157
      %s179 = sphi 0, %s181
      %s182 = sphi 0, %s179
      %s183 = sphi 0, %s182
      %s199 = sphi 0, %s183
      %s205 = sphi 0, %s207
      %s208 = sphi 0, %s205
      %s209 = sphi 0, %s208
      %s225 = sphi 0, %s209
    $region4: #{tpu_custom_call.1} parent=1 // loop_header_branch
      %19 = sbr.rel (%p17) target = $region8
    $region5: #{tpu_custom_call.1} parent=1 // loop_body
      %s21 = ssub.s32 %s16, 1
      %s22 = ssub.s32 %s16, 2
      %s32 = sadd.s32 1, %s25
      %p33 = scmp.ge.s32.totalorder %s32, 1
      %s34 = scalar_select %p33, 0, %s32
      %s35 = sadd.s32 1, %s24
      %s36 = scalar_select %p33, %s35, %s24
      %p37 = scmp.ge.s32.totalorder %s36, 2
      %s38 = scalar_select %p37, 0, %s36
      %s39 = sadd.s32 1, %s23
      %s40 = scalar_select %p37, %s39, %s23
      %p41 = scmp.ge.s32.totalorder %s40, 1
      %s42 = scalar_select %p41, 0, %s40
      %s43 = ssub.s32 %s24, %s38
      %s44 = ssub.s32 %s23, %s42
      %s45 = sor.u32 %s43, %s44
      %s46 = ssub.s32 %s25, %s34
      %s47 = sor.u32 %s45, %s46
      %p48 = scmp.eq.s32.totalorder %s47, 0
      %s50 = sadd.s32 %s49, 1
      %s51 = scalar_select %p48, %s49, %s50
      %p54 = pneg %p48
      %p55 = scmp.eq.s32.totalorder %s16, 1
      %p56 = por %p54, %p55
      %p57 = scmp.ne.s32.totalorder %s49, %s52
      %p58 = scmp.eq.s32.totalorder %s16, 0
      %p59 = por %p57, %p58
      %p60 = scmp.ne.s32.totalorder %s49, %s52
      %p61 = scmp.eq.s32.totalorder %s21, 1
      %p62 = por %p60, %p61
      %p63 = scmp.ne.s32.totalorder %s52, %s53
      %p64 = scmp.eq.s32.totalorder %s21, 0
      %p65 = por %p63, %p64
      %p66 = scmp.ne.s32.totalorder %s52, %s53
      %p67 = scmp.eq.s32.totalorder %s22, 1
      %p68 = por %p66, %p67
      %p70 = scmp.ne.s32.totalorder %s53, %s69
      %p71 = scmp.eq.s32.totalorder %s22, 0
      %p72 = por %p70, %p71
      %s73 = ssub.s32 %s23, %s42
      %p74 = scmp.eq.s32.totalorder %s73, 0
      %s76 = sadd.s32 %s75, 1
      %s77 = scalar_select %p74, %s75, %s76
      %p80 = pneg %p74
      %p81 = scmp.eq.s32.totalorder %s16, 1
      %p82 = por %p80, %p81
      %p83 = scmp.ne.s32.totalorder %s75, %s78
      %p84 = scmp.eq.s32.totalorder %s16, 0
      %p85 = por %p83, %p84
      %p86 = scmp.ne.s32.totalorder %s75, %s78
      %p87 = scmp.eq.s32.totalorder %s21, 1
      %p88 = por %p86, %p87
      %p89 = scmp.ne.s32.totalorder %s78, %s79
      %p90 = scmp.eq.s32.totalorder %s21, 0
      %p91 = por %p89, %p90
      %p92 = scmp.ne.s32.totalorder %s78, %s79
      %p93 = scmp.eq.s32.totalorder %s22, 1
      %p94 = por %p92, %p93
      %p96 = scmp.ne.s32.totalorder %s79, %s95
      %p97 = scmp.eq.s32.totalorder %s22, 0
      %p98 = por %p96, %p97
      %s99 = ssub.s32 %s23, %s42
      %p100 = scmp.eq.s32.totalorder %s99, 0
      %s102 = sadd.s32 %s101, 1
      %s103 = scalar_select %p100, %s101, %s102
      %p106 = pneg %p100
      %p107 = scmp.eq.s32.totalorder %s16, 1
      %p108 = por %p106, %p107
      %p109 = scmp.ne.s32.totalorder %s101, %s104
      %p110 = scmp.eq.s32.totalorder %s16, 0
      %p111 = por %p109, %p110
      %p112 = scmp.ne.s32.totalorder %s101, %s104
      %p113 = scmp.eq.s32.totalorder %s21, 1
      %p114 = por %p112, %p113
      %p115 = scmp.ne.s32.totalorder %s104, %s105
      %p116 = scmp.eq.s32.totalorder %s21, 0
      %p117 = por %p115, %p116
      %p118 = scmp.ne.s32.totalorder %s104, %s105
      %p119 = scmp.eq.s32.totalorder %s22, 1
      %p120 = por %p118, %p119
      %p122 = scmp.ne.s32.totalorder %s105, %s121
      %p123 = scmp.eq.s32.totalorder %s22, 0
      %p124 = por %p122, %p123
      %s125 = ssub.s32 %s23, %s42
      %p126 = scmp.eq.s32.totalorder %s125, 0
      %s128 = sadd.s32 %s127, 1
      %s129 = scalar_select %p126, %s127, %s128
      %p132 = pneg %p126
      %p133 = scmp.eq.s32.totalorder %s16, 1
      %p134 = por %p132, %p133
      %p135 = scmp.ne.s32.totalorder %s127, %s130
      %p136 = scmp.eq.s32.totalorder %s16, 0
      %p137 = por %p135, %p136
      %p138 = scmp.ne.s32.totalorder %s127, %s130
      %p139 = scmp.eq.s32.totalorder %s21, 1
      %p140 = por %p138, %p139
      %p141 = scmp.ne.s32.totalorder %s130, %s131
      %p142 = scmp.eq.s32.totalorder %s21, 0
      %p143 = por %p141, %p142
      %p144 = scmp.ne.s32.totalorder %s130, %s131
      %p145 = scmp.eq.s32.totalorder %s22, 1
      %p146 = por %p144, %p145
      %p148 = scmp.ne.s32.totalorder %s131, %s147
      %p149 = scmp.eq.s32.totalorder %s22, 0
      %p150 = por %p148, %p149
      %s151 = ssub.s32 %s23, %s42
      %p152 = scmp.eq.s32.totalorder %s151, 0
      %s154 = sadd.s32 %s153, 1
      %s155 = scalar_select %p152, %s153, %s154
      %p158 = pneg %p152
      %p159 = scmp.eq.s32.totalorder %s16, 1
      %p160 = por %p158, %p159
      %p161 = scmp.ne.s32.totalorder %s153, %s156
      %p162 = scmp.eq.s32.totalorder %s16, 0
      %p163 = por %p161, %p162
      %p164 = scmp.ne.s32.totalorder %s153, %s156
      %p165 = scmp.eq.s32.totalorder %s21, 1
      %p166 = por %p164, %p165
      %p167 = scmp.ne.s32.totalorder %s156, %s157
      %p168 = scmp.eq.s32.totalorder %s21, 0
      %p169 = por %p167, %p168
      %p170 = scmp.ne.s32.totalorder %s156, %s157
      %p171 = scmp.eq.s32.totalorder %s22, 1
      %p172 = por %p170, %p171
      %p174 = scmp.ne.s32.totalorder %s157, %s173
      %p175 = scmp.eq.s32.totalorder %s22, 0
      %p176 = por %p174, %p175
      %s177 = ssub.s32 %s23, %s42
      %p178 = scmp.eq.s32.totalorder %s177, 0
      %s180 = sadd.s32 %s179, 1
      %s181 = scalar_select %p178, %s179, %s180
      %p184 = pneg %p178
      %p185 = scmp.eq.s32.totalorder %s16, 1
      %p186 = por %p184, %p185
      %p187 = scmp.ne.s32.totalorder %s179, %s182
      %p188 = scmp.eq.s32.totalorder %s16, 0
      %p189 = por %p187, %p188
      %p190 = scmp.ne.s32.totalorder %s179, %s182
      %p191 = scmp.eq.s32.totalorder %s21, 1
      %p192 = por %p190, %p191
      %p193 = scmp.ne.s32.totalorder %s182, %s183
      %p194 = scmp.eq.s32.totalorder %s21, 0
      %p195 = por %p193, %p194
      %p196 = scmp.ne.s32.totalorder %s182, %s183
      %p197 = scmp.eq.s32.totalorder %s22, 1
      %p198 = por %p196, %p197
      %p200 = scmp.ne.s32.totalorder %s183, %s199
      %p201 = scmp.eq.s32.totalorder %s22, 0
      %p202 = por %p200, %p201
      %s203 = ssub.s32 %s23, %s42
      %p204 = scmp.eq.s32.totalorder %s203, 0
      %s206 = sadd.s32 %s205, 1
      %s207 = scalar_select %p204, %s205, %s206
      %p210 = pneg %p204
      %p211 = scmp.eq.s32.totalorder %s16, 1
      %p212 = por %p210, %p211
      %p213 = scmp.ne.s32.totalorder %s205, %s208
      %p214 = scmp.eq.s32.totalorder %s16, 0
      %p215 = por %p213, %p214
      %p216 = scmp.ne.s32.totalorder %s205, %s208
      %p217 = scmp.eq.s32.totalorder %s21, 1
      %p218 = por %p216, %p217
      %p219 = scmp.ne.s32.totalorder %s208, %s209
      %p220 = scmp.eq.s32.totalorder %s21, 0
      %p221 = por %p219, %p220
      %p222 = scmp.ne.s32.totalorder %s208, %s209
      %p223 = scmp.eq.s32.totalorder %s22, 1
      %p224 = por %p222, %p223
      %p226 = scmp.ne.s32.totalorder %s209, %s225
      %p227 = scmp.eq.s32.totalorder %s22, 0
      %p228 = por %p226, %p227
      %p229 = scmp.le.s32.totalorder 1, %s16
      %p230 = scmp.lt.s32.totalorder %s16, 3
      %p231 = pnand %p229, %p230
      %p232 = pneg %p231
      // Predicated region
      $region9: #{tpu_custom_call.1} parent=5 // pred_check
        _
      $region10: #{tpu_custom_call.1} parent=5 // pred_check_branch
        %234 = sbr.rel (%p231) target = $region12
      $region11: #{tpu_custom_call.1} parent=5 // pred_region
        %s235 = ssub.s32 %s16, 1
        // Predicated region
        $region13: #{tpu_custom_call.1} parent=11 // pred_check
          %p236 = pneg %p91
        $region14: #{tpu_custom_call.1} parent=11 // pred_check_branch
          %238 = sbr.rel (%p236) target = $region16
        $region15: #{tpu_custom_call.1} parent=11 // pred_region
          %p239 = scmp.lt.s32.totalorder %s26, 0
          %s240 = scalar_select %p239, %s26, 0
          %s241 = smul.addr %s240, 4
          %s242 = scalar_lea.vmem %s1, %s241
        $region16: #{tpu_custom_call.1} parent=11 // pred_fallthru
          _
        // Predicated region
        $region17: #{tpu_custom_call.1} parent=11 // pred_check
          %p243 = pneg %p117
        $region18: #{tpu_custom_call.1} parent=11 // pred_check_branch
          %245 = sbr.rel (%p243) target = $region20
        $region19: #{tpu_custom_call.1} parent=11 // pred_region
          %p246 = scmp.lt.s32.totalorder %s26, 0
          %s247 = scalar_select %p246, %s26, 0
          %s248 = smul.addr %s247, 4
          %s249 = scalar_lea.vmem %s2, %s248
        $region20: #{tpu_custom_call.1} parent=11 // pred_fallthru
          _
      $region12: #{tpu_custom_call.1} parent=5 // pred_fallthru
        _
      %p250 = scmp.lt.s32.totalorder %s16, 2
      // Predicated region
      $region21: #{tpu_custom_call.1} parent=5 // pred_check
        %p251 = pneg %p250
      $region22: #{tpu_custom_call.1} parent=5 // pred_check_branch
        %253 = sbr.rel (%p251) target = $region24
      $region23: #{tpu_custom_call.1} parent=5 // pred_region
        // Predicated region
        $region25: #{tpu_custom_call.1} parent=23 // pred_check
          %p254 = pneg %p59
        $region26: #{tpu_custom_call.1} parent=23 // pred_check_branch
          %256 = sbr.rel (%p254) target = $region28
        $region27: #{tpu_custom_call.1} parent=23 // pred_region
          %s257 = sand.u32 %s49, 1
          %s258 = scalar_lea.sflag [#allocation5], %s257
          %s259 = sand.u32 %s49, 1
          %s260 = smul.addr %s259, 8
          %s261 = scalar_lea.vmem [#allocation4], %s260
          %s262 = smul.u32 2, %s25
          %s264 = ssub.s32 128, 128
          %265 = vsyncadd %s258, %s264
          %s266 = smul.addr %s23, 2
          %s267 = sadd.s32 %s262, %s266
          %s268 = smul.addr %s24, 2
          %s269 = sadd.s32 %s267, %s268
          %s270 = smul.addr %s269, 64
          %s271 = scalar_lea.hbm %s0, %s270
          %s273 = sshll.u32 %s261, 4
          %s274 = int_to_ptr.vmem [resolvable:$true] %s273
          %276 = dma.hbm_to_vmem [thread:$0]  %s271, 128, %s274, %s258
        $region28: #{tpu_custom_call.1} parent=23 // pred_fallthru
          _
      $region24: #{tpu_custom_call.1} parent=5 // pred_fallthru
        _
      %p277 = scmp.le.s32.totalorder 1, %s16
      %p278 = scmp.lt.s32.totalorder %s16, 3
      %p279 = pnand %p277, %p278
      %p280 = pneg %p279
      // Predicated region
      $region29: #{tpu_custom_call.1} parent=5 // pred_check
        _
      $region30: #{tpu_custom_call.1} parent=5 // pred_check_branch
        %282 = sbr.rel (%p279) target = $region32
      $region31: #{tpu_custom_call.1} parent=5 // pred_region
        %s283 = ssub.s32 %s16, 1
        %s284 = sand.u32 %s52, 1
        %s285 = scalar_lea.sflag [#allocation5], %s284
        %s286 = sand.u32 %s52, 1
        %s287 = smul.addr %s286, 8
        %s288 = scalar_lea.vmem [#allocation4], %s287
        // Predicated region
        $region33: #{tpu_custom_call.1} parent=31 // pred_check
          %p289 = pneg %p65
        $region34: #{tpu_custom_call.1} parent=31 // pred_check_branch
          %291 = sbr.rel (%p289) target = $region36
        $region35: #{tpu_custom_call.1} parent=31 // pred_region
          %292 = dma.done %s285, 128
        $region36: #{tpu_custom_call.1} parent=31 // pred_fallthru
          _
        %s293 = sand.u32 %s52, 1
        %s294 = scalar_lea.sflag [#allocation5], %s293
        %s295 = sand.u32 %s52, 1
        %s296 = smul.addr %s295, 8
        %s297 = scalar_lea.vmem [#allocation4], %s296
        %p298 = pneg %p65
        %p299 = pneg %p62
        %p300 = scmp.lt.s32.totalorder %s26, 0
        %s301 = scalar_select %p300, %s26, 0
        %s302 = smul.addr %s301, 4
        %s303 = scalar_lea.vmem %s1, %s302
        %p304 = pneg %p91
        %p305 = pneg %p88
        %p306 = scmp.lt.s32.totalorder %s26, 0
        %s307 = scalar_select %p306, %s26, 0
        %s308 = smul.addr %s307, 4
        %s309 = scalar_lea.vmem %s2, %s308
        %p310 = pneg %p117
        %p311 = pneg %p114
        %p312 = pneg %p143
        %p313 = pneg %p140
        %p314 = scmp.lt.s32.totalorder %s26, 0
        %s315 = scalar_select %p314, %s26, 0
        %s316 = smul.addr %s315, 4
        %s317 = scalar_lea.vmem %s3, %s316
        %p318 = pneg %p169
        %p319 = pneg %p166
        %p320 = scmp.lt.s32.totalorder %s26, 0
        %s321 = scalar_select %p320, %s26, 0
        %s322 = smul.addr %s321, 4
        %s323 = scalar_lea.vmem %s4, %s322
        %p324 = pneg %p195
        %p325 = pneg %p192
        %p326 = scmp.lt.s32.totalorder %s26, 0
        %s327 = scalar_select %p326, %s26, 0
        %s328 = smul.addr %s327, 4
        %s329 = scalar_lea.vmem %s5, %s328
        %p330 = pneg %p221
        %p331 = pneg %p218
        %p332 = scmp.lt.s32.totalorder %s26, 0
        %s333 = scalar_select %p332, %s26, 0
        %s334 = smul.addr %s333, 4
        %s335 = scalar_lea.vmem %s6, %s334
        %s336 = smul.u32 2, %s28
        %p337 = scmp.lt.s32.totalorder %s26, 0
        %s338 = scalar_select %p337, %s26, 0
        %s339 = smul.addr %s338, 4
        %s340 = scalar_lea.vmem %s1, %s339
        %p341 = scmp.lt.s32.totalorder %s26, 0
        %s342 = scalar_select %p341, %s26, 0
        %s343 = smul.addr %s342, 4
        %s344 = scalar_lea.vmem %s2, %s343
        %p345 = scmp.lt.s32.totalorder %s26, 0
        %s346 = scalar_select %p345, %s26, 0
        %s347 = smul.addr %s346, 4
        %s348 = scalar_lea.vmem %s3, %s347
        %p349 = scmp.lt.s32.totalorder %s26, 0
        %s350 = scalar_select %p349, %s26, 0
        %s351 = smul.addr %s350, 4
        %s352 = scalar_lea.vmem %s4, %s351
        %p353 = scmp.lt.s32.totalorder %s26, 0
        %s354 = scalar_select %p353, %s26, 0
        %s355 = smul.addr %s354, 4
        %s356 = scalar_lea.vmem %s5, %s355
        %p357 = scmp.lt.s32.totalorder %s26, 0
        %s358 = scalar_select %p357, %s26, 0
        %s359 = smul.addr %s358, 4
        %s360 = scalar_lea.vmem %s6, %s359
        %p361 = scmp.eq.s32.totalorder %s27, 0
        %p362 = scmp.eq.s32.totalorder %s28, 0
        %p363 = pnand %p361, %p362
        %p364 = pneg %p363
        %p365 = scmp.eq.s32.totalorder %s27, 1
        %p366 = pnand %p365, %p362
        %p367 = pneg %p366
        // Predicated region
        $region37: #{tpu_custom_call.1} parent=31 // pred_check
          _
        $region38: #{tpu_custom_call.1} parent=31 // pred_check_branch
          %369 = sbr.rel (%p363) target = $region40
        $region39: #{tpu_custom_call.1} parent=31 // pred_region
          %370 = vst [vmem:[#allocation2] sm:$0xf] 0.0
          %371 = vst [vmem:[#allocation3] sm:$0xf] 0.0
        $region40: #{tpu_custom_call.1} parent=31 // pred_fallthru
          _
        %v372 = vld [vmem:[%s288] sm:$0xff]
        %v373 = vld [vmem:[#allocation2] sm:$0xf]
        %v374 = vld [vmem:[#allocation3] sm:$0xf]
        %v375 = vadd.f32 %v373, %v372
        %v376 = vmul.f32 %v372, %v372
        %v377 = vadd.f32 %v374, %v376
        %v379 = vcombine.high %v372, %v372
        %v381 = vadd.f32 %v375, %v379
        %v382 = vrot.slane %v372, 4
        %v384 = vmul.f32 %v382, %v382
        %v385 = vadd.f32 %v377, %v384
        %386 = vst [vmem:[#allocation2] sm:$0xf] %v381
        %387 = vst [vmem:[#allocation3] sm:$0xf] %v385
        // Predicated region
        $region41: #{tpu_custom_call.1} parent=31 // pred_check
          _
        $region42: #{tpu_custom_call.1} parent=31 // pred_check_branch
          %389 = sbr.rel (%p366) target = $region44
        $region43: #{tpu_custom_call.1} parent=31 // pred_region
          %v390 = vld [vmem:[#allocation2] sm:$0xf]
          %vm391 = vcmask 1043456
          %v392 = vsel %vm391, %v390, 0.0
          %393 = vadd.xlane.f32.xlu0 %v392
          %v394 = vpop.xlane.xlu0 %393
          %v395 = vmul.f32 %v394, 0.001953125
          %v396 = vld [vmem:[#allocation3] sm:$0xf]
          %v397 = vsel %vm391, %v396, 0.0
          %398 = vadd.xlane.f32.xlu0 %v397
          %v399 = vpop.xlane.xlu0 %398
          %v400 = vmul.f32 %v399, 0.001953125
          %v401 = vmul.f32 %v395, %v395
          %v402 = vsub.f32 %v400, %v401
          %v403 = vmax.f32 %v402, 0.0
          %vm404 = vcmask 3072
          %405 = vst.msk [vmem:[%s348] sm:$0xf] %vm404, %v395
          %v406 = vadd.f32 %v403, 1e-05
          %v407 = vrsqrt.pop %v406
          %408 = vst.msk [vmem:[%s352] sm:$0xf] %vm404, %v407
          %v409 = vmul.f32 %v403, 1.0019569
          %v410 = vld [vmem:[%s340] sm:$0xf]
          %v411 = vmul.f32 %v410, 0.9
          %v412 = vmul.f32 %v395, 0.1
          %v413 = vadd.f32 %v411, %v412
          %414 = vst.msk [vmem:[%s356] sm:$0xf] %vm404, %v413
          %v415 = vld [vmem:[%s344] sm:$0xf]
          %v416 = vmul.f32 %v415, 0.9
          %v417 = vmul.f32 %v409, 0.1
          %v418 = vadd.f32 %v416, %v417
          %419 = vst.msk [vmem:[%s360] sm:$0xf] %vm404, %v418
        $region44: #{tpu_custom_call.1} parent=31 // pred_fallthru
          _
        %p420 = scmp.lt.s32.totalorder %s26, 0
        %s421 = scalar_select %p420, %s26, 0
        %s422 = smul.addr %s421, 4
        %s423 = scalar_lea.vmem %s3, %s422
        %p424 = scmp.lt.s32.totalorder %s26, 0
        %s425 = scalar_select %p424, %s26, 0
        %s426 = smul.addr %s425, 4
        %s427 = scalar_lea.vmem %s4, %s426
        %p428 = scmp.lt.s32.totalorder %s26, 0
        %s429 = scalar_select %p428, %s26, 0
        %s430 = smul.addr %s429, 4
        %s431 = scalar_lea.vmem %s5, %s430
        %p432 = scmp.lt.s32.totalorder %s26, 0
        %s433 = scalar_select %p432, %s26, 0
        %s434 = smul.addr %s433, 4
        %s435 = scalar_lea.vmem %s6, %s434
        // Predicated region
        $region45: #{tpu_custom_call.1} parent=31 // pred_check
          %p436 = pneg %p140
        $region46: #{tpu_custom_call.1} parent=31 // pred_check_branch
          %438 = sbr.rel (%p436) target = $region48
        $region47: #{tpu_custom_call.1} parent=31 // pred_region
          _
        $region48: #{tpu_custom_call.1} parent=31 // pred_fallthru
          _
        // Predicated region
        $region49: #{tpu_custom_call.1} parent=31 // pred_check
          %p439 = pneg %p166
        $region50: #{tpu_custom_call.1} parent=31 // pred_check_branch
          %441 = sbr.rel (%p439) target = $region52
        $region51: #{tpu_custom_call.1} parent=31 // pred_region
          _
        $region52: #{tpu_custom_call.1} parent=31 // pred_fallthru
          _
        // Predicated region
        $region53: #{tpu_custom_call.1} parent=31 // pred_check
          %p442 = pneg %p192
        $region54: #{tpu_custom_call.1} parent=31 // pred_check_branch
          %444 = sbr.rel (%p442) target = $region56
        $region55: #{tpu_custom_call.1} parent=31 // pred_region
          _
        $region56: #{tpu_custom_call.1} parent=31 // pred_fallthru
          _
        // Predicated region
        $region57: #{tpu_custom_call.1} parent=31 // pred_check
          %p445 = pneg %p218
        $region58: #{tpu_custom_call.1} parent=31 // pred_check_branch
          %447 = sbr.rel (%p445) target = $region60
        $region59: #{tpu_custom_call.1} parent=31 // pred_region
          _
        $region60: #{tpu_custom_call.1} parent=31 // pred_fallthru
          _
        // Predicated region
        $region61: #{tpu_custom_call.1} parent=31 // pred_check
          %p448 = pneg %p140
        $region62: #{tpu_custom_call.1} parent=31 // pred_check_branch
          %450 = sbr.rel (%p448) target = $region64
        $region63: #{tpu_custom_call.1} parent=31 // pred_region
          %p451 = scmp.lt.s32.totalorder %s26, 0
          %s452 = scalar_select %p451, %s26, 0
          %s453 = smul.addr %s452, 4
          %s454 = scalar_lea.vmem %s3, %s453
        $region64: #{tpu_custom_call.1} parent=31 // pred_fallthru
          _
        // Predicated region
        $region65: #{tpu_custom_call.1} parent=31 // pred_check
          %p455 = pneg %p166
        $region66: #{tpu_custom_call.1} parent=31 // pred_check_branch
          %457 = sbr.rel (%p455) target = $region68
        $region67: #{tpu_custom_call.1} parent=31 // pred_region
          %p458 = scmp.lt.s32.totalorder %s26, 0
          %s459 = scalar_select %p458, %s26, 0
          %s460 = smul.addr %s459, 4
          %s461 = scalar_lea.vmem %s4, %s460
        $region68: #{tpu_custom_call.1} parent=31 // pred_fallthru
          _
        // Predicated region
        $region69: #{tpu_custom_call.1} parent=31 // pred_check
          %p462 = pneg %p192
        $region70: #{tpu_custom_call.1} parent=31 // pred_check_branch
          %464 = sbr.rel (%p462) target = $region72
        $region71: #{tpu_custom_call.1} parent=31 // pred_region
          %p465 = scmp.lt.s32.totalorder %s26, 0
          %s466 = scalar_select %p465, %s26, 0
          %s467 = smul.addr %s466, 4
          %s468 = scalar_lea.vmem %s5, %s467
        $region72: #{tpu_custom_call.1} parent=31 // pred_fallthru
          _
        // Predicated region
        $region73: #{tpu_custom_call.1} parent=31 // pred_check
          %p469 = pneg %p218
        $region74: #{tpu_custom_call.1} parent=31 // pred_check_branch
          %471 = sbr.rel (%p469) target = $region76
        $region75: #{tpu_custom_call.1} parent=31 // pred_region
          %p472 = scmp.lt.s32.totalorder %s26, 0
          %s473 = scalar_select %p472, %s26, 0
          %s474 = smul.addr %s473, 4
          %s475 = scalar_lea.vmem %s6, %s474
        $region76: #{tpu_custom_call.1} parent=31 // pred_fallthru
          _
      $region32: #{tpu_custom_call.1} parent=5 // pred_fallthru
        _
      %p476 = scmp.le.s32.totalorder 2, %s16
      // Predicated region
      $region77: #{tpu_custom_call.1} parent=5 // pred_check
        %p477 = pneg %p476
      $region78: #{tpu_custom_call.1} parent=5 // pred_check_branch
        %479 = sbr.rel (%p477) target = $region80
      $region79: #{tpu_custom_call.1} parent=5 // pred_region
        %s480 = ssub.s32 %s16, 2
      $region80: #{tpu_custom_call.1} parent=5 // pred_fallthru
        _
    $region6: #{tpu_custom_call.1} parent=1 // loop_footer
      %s20 = sadd.s32 1, %s16
    $region7: #{tpu_custom_call.1} parent=1 // loop_footer_branch
      %15 = sbr.rel target = $region3
    $region8: #{tpu_custom_call.1} parent=1 // loop_exit
      _
    %481 = vsyncpa [#allocation5], 1
    %s482 = scalar_lea.sflag [#allocation5], 1
    %483 = vsyncpa %s482, 1

</llo_original>
